<compile_context>
chip_gen: v5e
topology: v5e:2x2
jax: 0.10.0
libtpu: 0.0.40
codegen_flags: <defaults>
</compile_context>

<pallas_src>
import functools
import math
from typing import NamedTuple

import jax
import jax.numpy as jnp
from jax import lax
from jax.experimental import pallas as pl
from jax.experimental.pallas import tpu as pltpu


def _round_up(n, m):
    return (n + m - 1) // m * m


class PackedParams(NamedTuple):
    w_x: jax.Array      # (I, N_pad)  bf16  -- x-part of fused [Wh | Wo]
    w_h: jax.Array      # (H, N_pad)  bf16  -- h-part of fused [Wh | Wo]
    bias: jax.Array     # (1, N_pad)  f32   -- fused [bh | bo], lane-padded
    input_size: int
    hidden_size: int
    output_size: int


def prepare_params(w_h, b_h, w_o, b_o, input_size, *, compute_dtype=jnp.bfloat16):
    """One-time weight packing (hoisted out of the per-step path).

    Weights are stored (in_features, out_features) == PyTorch weight.T:
      w_h: (I+H, H), b_h: (H,), w_o: (I+H, O), b_o: (O,)
    """
    fan_in, H = w_h.shape
    O = w_o.shape[1]
    I = input_size
    assert fan_in == I + H
    N = H + O
    N_pad = _round_up(N, 128)                                # lane-dense slab width

    w_cat = jnp.concatenate([w_h, w_o], axis=1)              # (I+H, N)
    w_cat = jnp.pad(w_cat, ((0, 0), (0, N_pad - N)))         # (I+H, N_pad)
    b_cat = jnp.concatenate([b_h, b_o], axis=0)
    b_cat = jnp.pad(b_cat, (0, N_pad - N)).reshape(1, N_pad).astype(jnp.float32)

    return PackedParams(
        w_x=w_cat[:I].astype(compute_dtype),                 # (I, N_pad)
        w_h=w_cat[I:].astype(compute_dtype),                 # (H, N_pad)
        bias=b_cat,
        input_size=I, hidden_size=H, output_size=O)


def _rnn_seq_kernel(h0_ref, x_ref, wx_ref, wh_ref, b_ref, slab_ref, h_scr,
                    *, hidden_size, compute_dtype):
    """One grid step == one RNN timestep.  Hidden state lives in h_scr (f32)."""
    t = pl.program_id(0)

    @pl.when(t == 0)
    def _():
        h_scr[...] = h0_ref[...]                       # load initial hidden once

    x_t = x_ref[0]                                     # (B, I) bf16
    h_bf = h_scr[...].astype(compute_dtype)            # bf16 only at the MXU input
    # Fused heads, no in-kernel concat: slab = x@Wx + h@Wh + b -> (B, N_pad) f32
    acc = jnp.dot(x_t, wx_ref[...], preferred_element_type=jnp.float32)
    acc = acc + jnp.dot(h_bf, wh_ref[...], preferred_element_type=jnp.float32)
    acc = acc + b_ref[...]                             # f32 epilogue
    slab_ref[0] = acc                                  # lane-dense unmasked store
    h_scr[...] = acc[:, :hidden_size]                  # carry new hidden in f32


def ex_rnn_sequence(x_seq, h0, params: PackedParams):
    """Run T fused ExRNN cell steps in a single pallas_call.

    x_seq: (T, B, I) f32;  h0: (B, H) f32.
    Returns (outputs (T, B, O) f32, final hidden (B, H) f32).
    """
    T, B, I = x_seq.shape
    H, O = params.hidden_size, params.output_size
    N = H + O
    N_pad = params.bias.shape[1]
    B_pad = _round_up(max(B, 8), 8)                    # fill all 8 sublanes

    x_c = x_seq.astype(params.w_x.dtype)
    h0_c = h0.astype(jnp.float32)
    if B_pad != B:
        x_c = jnp.pad(x_c, ((0, 0), (0, B_pad - B), (0, 0)))
        h0_c = jnp.pad(h0_c, ((0, B_pad - B), (0, 0)))

    kernel = functools.partial(_rnn_seq_kernel, hidden_size=H,
                               compute_dtype=params.w_x.dtype)

    slab = pl.pallas_call(
        kernel,
        out_shape=jax.ShapeDtypeStruct((T, B_pad, N_pad), jnp.float32),
        grid_spec=pltpu.PrefetchScalarGridSpec(
            num_scalar_prefetch=0,
            grid=(T,),
            in_specs=[
                pl.BlockSpec((B_pad, H), lambda t: (0, 0)),         # h0 (resident)
                pl.BlockSpec((1, B_pad, I), lambda t: (t, 0, 0)),   # x_t per step
                pl.BlockSpec((I, N_pad), lambda t: (0, 0)),         # Wx (resident)
                pl.BlockSpec((H, N_pad), lambda t: (0, 0)),         # Wh (resident)
                pl.BlockSpec((1, N_pad), lambda t: (0, 0)),         # bias (resident)
            ],
            out_specs=pl.BlockSpec((1, B_pad, N_pad), lambda t: (t, 0, 0)),
            scratch_shapes=[pltpu.VMEM((B_pad, H), jnp.float32)],   # hidden carry
        ),
        compiler_params=pltpu.CompilerParams(
            dimension_semantics=("arbitrary",)),       # time axis is sequential
    )(h0_c, x_c, params.w_x, params.w_h, params.bias)

    outputs = slab[:, :B, H:N]                         # (T, B, O)
    hidden_final = slab[T - 1, :B, :H]                 # (B, H)
    return outputs, hidden_final


def ex_rnn_forward(x, hidden_state, params: PackedParams):
    """Single ExRNN.forward cell step: returns (output, new hidden)."""
    out_seq, h_new = ex_rnn_sequence(x[None], hidden_state, params)
    return out_seq[0], h_new


def init_params(key, input_size, hidden_size, output_size):
    """Deterministic nn.Linear-style init (uniform +-1/sqrt(fan_in))."""
    k1, k2, k3, k4 = jax.random.split(key, 4)
    fan_in = input_size + hidden_size
    bound = 1.0 / math.sqrt(fan_in)
    # Stored as (in_features, out_features) == PyTorch weight transposed.
    w_h = jax.random.uniform(k1, (fan_in, hidden_size), jnp.float32, -bound, bound)
    b_h = jax.random.uniform(k2, (hidden_size,), jnp.float32, -bound, bound)
    w_o = jax.random.uniform(k3, (fan_in, output_size), jnp.float32, -bound, bound)
    b_o = jax.random.uniform(k4, (output_size,), jnp.float32, -bound, bound)
    return w_h, b_h, w_o, b_o


def _reference_sequence(x_seq, h0, params: PackedParams):
    """Precision-matched pure-JAX reference (same bf16 casts, f32 accum,
    f32-resident hidden, f32 bias epilogue, same packed weights)."""
    H, O = params.hidden_size, params.output_size
    wx = params.w_x[:, :H + O]
    wh = params.w_h[:, :H + O]
    b = params.bias[0, :H + O]
    x_bf = x_seq.astype(wx.dtype)

    def step(h, x_t):
        h_bf = h.astype(wx.dtype)
        acc = (jnp.dot(x_t, wx, preferred_element_type=jnp.float32)
               + jnp.dot(h_bf, wh, preferred_element_type=jnp.float32) + b)
        return acc[:, :H], acc[:, H:]

    h_final, outs = lax.scan(step, h0.astype(jnp.float32), x_bf)
    return outs, h_final


if __name__ == "__main__":
    # Small shapes consistent with the module: batch=2, input_size=16,
    # hidden_size=64 (module default), output_size=2, seq_len=8.
    batch, input_size, hidden_size, output_size, seq_len = 2, 16, 64, 2, 8

    key = jax.random.PRNGKey(0)
    kx, kh, kp = jax.random.split(key, 3)

    x_seq = jax.random.normal(kx, (seq_len, batch, input_size), jnp.float32)
    hidden0 = jnp.zeros((batch, hidden_size), jnp.float32)      # init_hidden(bs)
    hidden_rand = jax.random.normal(kh, (batch, hidden_size), jnp.float32)

    w_h, b_h, w_o, b_o = init_params(kp, input_size, hidden_size, output_size)
    params = prepare_params(w_h, b_h, w_o, b_o, input_size)     # one-time packing

    # Full sequence (fused time loop, zero initial hidden -> init_hidden semantics).
    out_seq, hid_final = ex_rnn_sequence(x_seq, hidden0, params)
    # Single-step API with a nonzero hidden state (exercises the h @ Wh path).
    out1, hid1 = ex_rnn_forward(x_seq[0], hidden_rand, params)
    jax.block_until_ready((out_seq, hid_final, out1, hid1))

    ref_out_seq, ref_hid_final = _reference_sequence(x_seq, hidden0, params)
    ref_out1, ref_hid1 = _reference_sequence(x_seq[:1], hidden_rand, params)
    ref_out1, ref_hid1 = ref_out1[0], ref_hid1

    assert out_seq.shape == (seq_len, batch, output_size)
    assert hid_final.shape == (batch, hidden_size)
    assert out1.shape == (batch, output_size) and hid1.shape == (batch, hidden_size)

    # Single step: only f32 accumulation-order differences -> tight tolerance.
    assert jnp.allclose(out1, ref_out1, atol=1e-4), "output mismatch (single step)"
    assert jnp.allclose(hid1, ref_hid1, atol=1e-4), "hidden mismatch (single step)"
    # Sequence: rare bf16-ulp rounding flips of the recurrent hidden can
    # propagate a ~1e-3 difference; use a slightly looser tolerance.
    assert jnp.allclose(out_seq, ref_out_seq, atol=3e-3), "output mismatch (sequence)"
    assert jnp.allclose(hid_final, ref_hid_final, atol=3e-3), "hidden mismatch (sequence)"

    print("KERNEL_OK")
</pallas_src>

<mosaic_0001>
module attributes {stable_mosaic.version = 11 : i64} {
  func.func @_rnn_seq_kernel(%arg0: i32, %arg1: memref<8x64xf32, #tpu.memory_space<vmem>>, %arg2: memref<1x8x16xbf16, #tpu.memory_space<vmem>>, %arg3: memref<16x128xbf16, #tpu.memory_space<vmem>>, %arg4: memref<64x128xbf16, #tpu.memory_space<vmem>>, %arg5: memref<1x128xf32, #tpu.memory_space<vmem>>, %arg6: memref<1x8x128xf32, #tpu.memory_space<vmem>>, %arg7: memref<8x64xf32, #tpu.memory_space<vmem>>) attributes {dimension_semantics = [#tpu.dimension_semantics<arbitrary>], iteration_bounds = array<i64: 8>, scalar_prefetch = 0 : i64, scratch_operands = 1 : i64, tpu.core_type = #tpu.core_type<tc>, window_params = [{pipeline_mode = #tpu.pipeline_mode<synchronous>, transform_indices = @transform_0, window_bounds = array<i64: 8, 64>}, {transform_indices = @transform_1, window_bounds = array<i64: 1, 8, 16>}, {pipeline_mode = #tpu.pipeline_mode<synchronous>, transform_indices = @transform_2, window_bounds = array<i64: 16, 128>}, {pipeline_mode = #tpu.pipeline_mode<synchronous>, transform_indices = @transform_3, window_bounds = array<i64: 64, 128>}, {pipeline_mode = #tpu.pipeline_mode<synchronous>, transform_indices = @transform_4, window_bounds = array<i64: 1, 128>}, {transform_indices = @transform_5, window_bounds = array<i64: 1, 8, 128>}]} {
    %c0_i32 = arith.constant 0 : i32
    %0 = arith.cmpi eq, %arg0, %c0_i32 : i32
    %1 = arith.extui %0 : i1 to i32
    %c0_i32_0 = arith.constant 0 : i32
    %2 = arith.cmpi ne, %1, %c0_i32_0 : i32
    scf.if %2 {
      %c0_17 = arith.constant 0 : index
      %c0_18 = arith.constant 0 : index
      %20 = vector.load %arg1[%c0_17, %c0_18] : memref<8x64xf32, #tpu.memory_space<vmem>>, vector<8x64xf32>
      %c0_19 = arith.constant 0 : index
      %c0_20 = arith.constant 0 : index
      %21 = vector.load %arg7[%c0_19, %c0_20] : memref<8x64xf32, #tpu.memory_space<vmem>>, vector<8x64xf32>
      tpu.vector_store %arg7[%c0_19, %c0_20], %20 {strides = array<i32>} : memref<8x64xf32, #tpu.memory_space<vmem>>, vector<8x64xf32>,
    } else {
    }
    %c0 = arith.constant 0 : index
    %c0_1 = arith.constant 0 : index
    %c0_2 = arith.constant 0 : index
    %3 = vector.load %arg2[%c0, %c0_1, %c0_2] : memref<1x8x16xbf16, #tpu.memory_space<vmem>>, vector<1x8x16xbf16>
    %4 = vector.shape_cast %3 : vector<1x8x16xbf16> to vector<8x16xbf16>
    %c0_3 = arith.constant 0 : index
    %c0_4 = arith.constant 0 : index
    %5 = vector.load %arg7[%c0_3, %c0_4] : memref<8x64xf32, #tpu.memory_space<vmem>>, vector<8x64xf32>
    %6 = arith.truncf %5 : vector<8x64xf32> to vector<8x64xbf16>
    %c0_5 = arith.constant 0 : index
    %c0_6 = arith.constant 0 : index
    %7 = vector.load %arg3[%c0_5, %c0_6] : memref<16x128xbf16, #tpu.memory_space<vmem>>, vector<16x128xbf16>
    %cst = arith.constant dense<0.000000e+00> : vector<8x128xf32>
    %8 = tpu.matmul %4, %7, %cst {dimension_numbers = #tpu.dot_dimension_numbers<[1], [0], [0], [1], [0, 0, 1, 1], [], []>} : vector<8x16xbf16>, vector<16x128xbf16>, vector<8x128xf32> -> vector<8x128xf32>
    %c0_7 = arith.constant 0 : index
    %c0_8 = arith.constant 0 : index
    %9 = vector.load %arg4[%c0_7, %c0_8] : memref<64x128xbf16, #tpu.memory_space<vmem>>, vector<64x128xbf16>
    %cst_9 = arith.constant dense<0.000000e+00> : vector<8x128xf32>
    %10 = tpu.matmul %6, %9, %cst_9 {dimension_numbers = #tpu.dot_dimension_numbers<[1], [0], [0], [1], [0, 0, 1, 1], [], []>} : vector<8x64xbf16>, vector<64x128xbf16>, vector<8x128xf32> -> vector<8x128xf32>
    %11 = arith.addf %8, %10 : vector<8x128xf32>
    %c0_10 = arith.constant 0 : index
    %c0_11 = arith.constant 0 : index
    %12 = vector.load %arg5[%c0_10, %c0_11] : memref<1x128xf32, #tpu.memory_space<vmem>>, vector<1x128xf32>
    %13 = vector.broadcast %12 : vector<1x128xf32> to vector<8x128xf32>
    %14 = arith.addf %11, %13 : vector<8x128xf32>
    %c0_12 = arith.constant 0 : index
    %c0_13 = arith.constant 0 : index
    %c0_14 = arith.constant 0 : index
    %15 = vector.load %arg6[%c0_12, %c0_13, %c0_14] : memref<1x8x128xf32, #tpu.memory_space<vmem>>, vector<1x8x128xf32>
    %16 = vector.shape_cast %15 : vector<1x8x128xf32> to vector<8x128xf32>
    %17 = vector.shape_cast %14 : vector<8x128xf32> to vector<1x8x128xf32>
    tpu.vector_store %arg6[%c0_12, %c0_13, %c0_14], %17 {strides = array<i32>} : memref<1x8x128xf32, #tpu.memory_space<vmem>>, vector<1x8x128xf32>,
    %18 = vector.extract_strided_slice %14 {offsets = [0, 0], sizes = [8, 64], strides = [1, 1]} : vector<8x128xf32> to vector<8x64xf32>
    %c0_15 = arith.constant 0 : index
    %c0_16 = arith.constant 0 : index
    %19 = vector.load %arg7[%c0_15, %c0_16] : memref<8x64xf32, #tpu.memory_space<vmem>>, vector<8x64xf32>
    tpu.vector_store %arg7[%c0_15, %c0_16], %18 {strides = array<i32>} : memref<8x64xf32, #tpu.memory_space<vmem>>, vector<8x64xf32>,
    return
  }
  func.func @transform_0(%arg0: i32) -> (i32, i32) {
    %c0_i32 = arith.constant 0 : i32
    %c0_i32_0 = arith.constant 0 : i32
    %c0_i32_1 = arith.constant 0 : i32
    return %c0_i32, %c0_i32_0 : i32, i32
  }
  func.func @transform_1(%arg0: i32) -> (i32, i32, i32) {
    %c0_i32 = arith.constant 0 : i32
    %c0_i32_0 = arith.constant 0 : i32
    %c0_i32_1 = arith.constant 0 : i32
    return %arg0, %c0_i32, %c0_i32_0 : i32, i32, i32
  }
  func.func @transform_2(%arg0: i32) -> (i32, i32) {
    %c0_i32 = arith.constant 0 : i32
    %c0_i32_0 = arith.constant 0 : i32
    %c0_i32_1 = arith.constant 0 : i32
    return %c0_i32, %c0_i32_0 : i32, i32
  }
  func.func @transform_3(%arg0: i32) -> (i32, i32) {
    %c0_i32 = arith.constant 0 : i32
    %c0_i32_0 = arith.constant 0 : i32
    %c0_i32_1 = arith.constant 0 : i32
    return %c0_i32, %c0_i32_0 : i32, i32
  }
  func.func @transform_4(%arg0: i32) -> (i32, i32) {
    %c0_i32 = arith.constant 0 : i32
    %c0_i32_0 = arith.constant 0 : i32
    %c0_i32_1 = arith.constant 0 : i32
    return %c0_i32, %c0_i32_0 : i32, i32
  }
  func.func @transform_5(%arg0: i32) -> (i32, i32, i32) {
    %c0_i32 = arith.constant 0 : i32
    %c0_i32_0 = arith.constant 0 : i32
    %c0_i32_1 = arith.constant 0 : i32
    return %arg0, %c0_i32, %c0_i32_0 : i32, i32, i32
  }
}

</mosaic_0001>

<llo_original>
// kernel: tpu_custom_call.1
$region0: #{tpu_custom_call.1}
  #allocation0 [shape = 'u32[]', space=smem, size = 0x4, offset = 0x4, fixed_abs, tag = 'smem constant byte address 0x4 - core index']
  #allocation1 [shape = 'u32[72,128]{1,0:T(1,128)}', space=vmem, size = 0x9000, scoped, tag = 'internal scratch']
  #allocation2 [shape = 'f32[8,64]{1,0:T(8,128)}', space=vmem, size = 0x1000, scoped, tag = 'scratch operand']
  %s0 = inlined_call_operand.hbm [shape: f32[8,64], index: 0, kind: input, shape index: {}]
  %s1 = inlined_call_operand.hbm [shape: bf16[8,8,16], index: 1, kind: input, shape index: {}]
  %s2 = inlined_call_operand.hbm [shape: bf16[16,128], index: 2, kind: input, shape index: {}]
  %s3 = inlined_call_operand.hbm [shape: bf16[64,128], index: 3, kind: input, shape index: {}]
  %s4 = inlined_call_operand.vmem [shape: f32[1,128], index: 4, kind: input, shape index: {}]
  %s5 = inlined_call_operand.hbm [shape: f32[8,8,128], index: 5, kind: output, shape index: {}]
  %s6 = sld [smem:[#allocation0]]
  $region73: #{tpu_custom_call.1} parent=0
    _
  %s8 = ssub.s32 1, %s6
  %s9 = scalar_select 0, %s8, %s6
  $region1: #{tpu_custom_call.1} parent=0
    #allocation3 [shape = 'u8[4096]{0}', space=vmem, size = 0x1000, scoped, tag = 'input window, operand 0, single buffered']
    #allocation4 [shape = 's32[2]{0}', space=sflag, size = 0x8, scoped, tag = 'scoped memory for tpu_custom_call.1']
    #allocation5 [shape = 's32[2]{0}', space=sflag, size = 0x8, scoped, tag = 'scoped memory for tpu_custom_call.1']
    #allocation6 [shape = 'u8[4096]{0}', space=vmem, size = 0x1000, scoped, tag = 'input window, operand 1']
    #allocation7 [shape = 's32[2]{0}', space=sflag, size = 0x8, scoped, tag = 'scoped memory for tpu_custom_call.1']
    #allocation8 [shape = 'u8[4096]{0}', space=vmem, size = 0x1000, scoped, tag = 'input window, operand 2, single buffered']
    #allocation9 [shape = 'u8[16384]{0}', space=vmem, size = 0x4000, scoped, tag = 'input window, operand 3, single buffered']
    #allocation10 [shape = 's32[1]{0}', space=sflag, size = 0x4, scoped, tag = 'scoped memory for tpu_custom_call.1']
    #allocation11 [shape = 'u8[8192]{0}', space=vmem, size = 0x2000, scoped, tag = 'output window, operand 0']
    %10 = vsyncpa [#allocation4], 0
    %11 = vsyncpa [#allocation7], 0
    %s12 = scalar_lea.sflag [#allocation7], 1
    %13 = vsyncpa %s12, 0
    %14 = vsyncpa [#allocation10], 0
    %15 = vsyncpa [#allocation5], 0
    %s16 = scalar_lea.sflag [#allocation5], 1
    %17 = vsyncpa %s16, 0
    loop: start=0, step=1, limit=10
    $region2: #{tpu_custom_call.1} parent=1 // loop_pre_header
      _
    $region3: #{tpu_custom_call.1} parent=1 // loop_header
      %s19 = sphi 0, %s23
      %p20 = scmp.ge.s32.totalorder %s19, 10
      %s27 = sphi 0, %s27
      %s29 = sphi 0, %s27
      %s30 = sphi 0, %s29
      %s44 = sphi 0, %s30
      %s50 = sphi 0, %s52
      %s53 = sphi 0, %s50
      %s54 = sphi 0, %s53
      %s70 = sphi 0, %s54
      %s74 = sphi 0, %s74
      %s76 = sphi 0, %s74
      %s77 = sphi 0, %s76
      %s91 = sphi 0, %s77
      %s95 = sphi 0, %s95
      %s97 = sphi 0, %s95
      %s98 = sphi 0, %s97
      %s112 = sphi 0, %s98
      %s116 = sphi 0, %s116
      %s118 = sphi 0, %s116
      %s119 = sphi 0, %s118
      %s133 = sphi 0, %s119
      %s139 = sphi 0, %s141
      %s142 = sphi 0, %s139
      %s143 = sphi 0, %s142
      %s159 = sphi 0, %s143
    $region4: #{tpu_custom_call.1} parent=1 // loop_header_branch
      %22 = sbr.rel (%p20) target = $region8
    $region5: #{tpu_custom_call.1} parent=1 // loop_body
      %s24 = ssub.s32 %s19, 1
      %s25 = ssub.s32 %s19, 2
      %s26 = sadd.s32 %s19, 1
      %s28 = sadd.s32 %s27, 1
      %p31 = scmp.eq.s32.totalorder %s19, 7
      %p32 = scmp.ne.s32.totalorder %s27, %s29
      %p33 = scmp.eq.s32.totalorder %s19, 0
      %p34 = por %p32, %p33
      %p35 = scmp.ne.s32.totalorder %s27, %s29
      %p36 = scmp.eq.s32.totalorder %s24, 7
      %p37 = por %p35, %p36
      %p38 = scmp.ne.s32.totalorder %s29, %s30
      %p39 = scmp.eq.s32.totalorder %s24, 0
      %p40 = por %p38, %p39
      %p41 = scmp.ne.s32.totalorder %s29, %s30
      %p42 = scmp.eq.s32.totalorder %s25, 7
      %p43 = por %p41, %p42
      %p45 = scmp.ne.s32.totalorder %s30, %s44
      %p46 = scmp.eq.s32.totalorder %s25, 0
      %p47 = por %p45, %p46
      %s48 = ssub.s32 %s19, %s26
      %p49 = scmp.eq.s32.totalorder %s48, 0
      %s51 = sadd.s32 %s50, 1
      %s52 = scalar_select %p49, %s50, %s51
      %p55 = pneg %p49
      %p56 = scmp.eq.s32.totalorder %s19, 7
      %p57 = por %p55, %p56
      %p58 = scmp.ne.s32.totalorder %s50, %s53
      %p59 = scmp.eq.s32.totalorder %s19, 0
      %p60 = por %p58, %p59
      %p61 = scmp.ne.s32.totalorder %s50, %s53
      %p62 = scmp.eq.s32.totalorder %s24, 7
      %p63 = por %p61, %p62
      %p64 = scmp.ne.s32.totalorder %s53, %s54
      %p65 = scmp.eq.s32.totalorder %s24, 0
      %p66 = por %p64, %p65
      %p67 = scmp.ne.s32.totalorder %s53, %s54
      %p68 = scmp.eq.s32.totalorder %s25, 7
      %p69 = por %p67, %p68
      %p71 = scmp.ne.s32.totalorder %s54, %s70
      %p72 = scmp.eq.s32.totalorder %s25, 0
      %p73 = por %p71, %p72
      %s75 = sadd.s32 %s74, 1
      %p78 = scmp.eq.s32.totalorder %s19, 7
      %p79 = scmp.ne.s32.totalorder %s74, %s76
      %p80 = scmp.eq.s32.totalorder %s19, 0
      %p81 = por %p79, %p80
      %p82 = scmp.ne.s32.totalorder %s74, %s76
      %p83 = scmp.eq.s32.totalorder %s24, 7
      %p84 = por %p82, %p83
      %p85 = scmp.ne.s32.totalorder %s76, %s77
      %p86 = scmp.eq.s32.totalorder %s24, 0
      %p87 = por %p85, %p86
      %p88 = scmp.ne.s32.totalorder %s76, %s77
      %p89 = scmp.eq.s32.totalorder %s25, 7
      %p90 = por %p88, %p89
      %p92 = scmp.ne.s32.totalorder %s77, %s91
      %p93 = scmp.eq.s32.totalorder %s25, 0
      %p94 = por %p92, %p93
      %s96 = sadd.s32 %s95, 1
      %p99 = scmp.eq.s32.totalorder %s19, 7
      %p100 = scmp.ne.s32.totalorder %s95, %s97
      %p101 = scmp.eq.s32.totalorder %s19, 0
      %p102 = por %p100, %p101
      %p103 = scmp.ne.s32.totalorder %s95, %s97
      %p104 = scmp.eq.s32.totalorder %s24, 7
      %p105 = por %p103, %p104
      %p106 = scmp.ne.s32.totalorder %s97, %s98
      %p107 = scmp.eq.s32.totalorder %s24, 0
      %p108 = por %p106, %p107
      %p109 = scmp.ne.s32.totalorder %s97, %s98
      %p110 = scmp.eq.s32.totalorder %s25, 7
      %p111 = por %p109, %p110
      %p113 = scmp.ne.s32.totalorder %s98, %s112
      %p114 = scmp.eq.s32.totalorder %s25, 0
      %p115 = por %p113, %p114
      %s117 = sadd.s32 %s116, 1
      %p120 = scmp.eq.s32.totalorder %s19, 7
      %p121 = scmp.ne.s32.totalorder %s116, %s118
      %p122 = scmp.eq.s32.totalorder %s19, 0
      %p123 = por %p121, %p122
      %p124 = scmp.ne.s32.totalorder %s116, %s118
      %p125 = scmp.eq.s32.totalorder %s24, 7
      %p126 = por %p124, %p125
      %p127 = scmp.ne.s32.totalorder %s118, %s119
      %p128 = scmp.eq.s32.totalorder %s24, 0
      %p129 = por %p127, %p128
      %p130 = scmp.ne.s32.totalorder %s118, %s119
      %p131 = scmp.eq.s32.totalorder %s25, 7
      %p132 = por %p130, %p131
      %p134 = scmp.ne.s32.totalorder %s119, %s133
      %p135 = scmp.eq.s32.totalorder %s25, 0
      %p136 = por %p134, %p135
      %s137 = ssub.s32 %s19, %s26
      %p138 = scmp.eq.s32.totalorder %s137, 0
      %s140 = sadd.s32 %s139, 1
      %s141 = scalar_select %p138, %s139, %s140
      %p144 = pneg %p138
      %p145 = scmp.eq.s32.totalorder %s19, 7
      %p146 = por %p144, %p145
      %p147 = scmp.ne.s32.totalorder %s139, %s142
      %p148 = scmp.eq.s32.totalorder %s19, 0
      %p149 = por %p147, %p148
      %p150 = scmp.ne.s32.totalorder %s139, %s142
      %p151 = scmp.eq.s32.totalorder %s24, 7
      %p152 = por %p150, %p151
      %p153 = scmp.ne.s32.totalorder %s142, %s143
      %p154 = scmp.eq.s32.totalorder %s24, 0
      %p155 = por %p153, %p154
      %p156 = scmp.ne.s32.totalorder %s142, %s143
      %p157 = scmp.eq.s32.totalorder %s25, 7
      %p158 = por %p156, %p157
      %p160 = scmp.ne.s32.totalorder %s143, %s159
      %p161 = scmp.eq.s32.totalorder %s25, 0
      %p162 = por %p160, %p161
      %p163 = scmp.le.s32.totalorder 1, %s19
      %p164 = scmp.lt.s32.totalorder %s19, 9
      %p165 = pnand %p163, %p164
      %p166 = pneg %p165
      // Predicated region
      $region9: #{tpu_custom_call.1} parent=5 // pred_check
        _
      $region10: #{tpu_custom_call.1} parent=5 // pred_check_branch
        %168 = sbr.rel (%p165) target = $region12
      $region11: #{tpu_custom_call.1} parent=5 // pred_region
        %s169 = ssub.s32 %s19, 1
        // Predicated region
        $region13: #{tpu_custom_call.1} parent=11 // pred_check
          %p170 = pneg %p40
        $region14: #{tpu_custom_call.1} parent=11 // pred_check_branch
          %172 = sbr.rel (%p170) target = $region16
        $region15: #{tpu_custom_call.1} parent=11 // pred_region
          %174 = vsyncadd [#allocation4], 0
          %s176 = sshll.u32 %s0, 4
          %s177 = int_to_ptr.hbm [resolvable:$true] %s176
          %s178 = sshll.u32 [#allocation3], 4
          %s179 = int_to_ptr.vmem [resolvable:$true] %s178
          %181 = dma.hbm_to_vmem [thread:$0]  %s177, 128, %s179, [#allocation4]
        $region16: #{tpu_custom_call.1} parent=11 // pred_fallthru
          _
        // Predicated region
        $region17: #{tpu_custom_call.1} parent=11 // pred_check
          %p182 = pneg %p87
        $region18: #{tpu_custom_call.1} parent=11 // pred_check_branch
          %184 = sbr.rel (%p182) target = $region20
        $region19: #{tpu_custom_call.1} parent=11 // pred_region
          %186 = vsyncadd [#allocation7], 0
          %s187 = sshll.u32 %s2, 4
          %s188 = int_to_ptr.hbm [resolvable:$true] %s187
          %s189 = sshll.u32 [#allocation8], 4
          %s190 = int_to_ptr.vmem [resolvable:$true] %s189
          %195 = dma.hbm_to_vmem [thread:$0]  %s188, 128, %s190, [#allocation7], 64, 64, 4
        $region20: #{tpu_custom_call.1} parent=11 // pred_fallthru
          _
        // Predicated region
        $region21: #{tpu_custom_call.1} parent=11 // pred_check
          %p196 = pneg %p108
        $region22: #{tpu_custom_call.1} parent=11 // pred_check_branch
          %198 = sbr.rel (%p196) target = $region24
        $region23: #{tpu_custom_call.1} parent=11 // pred_region
          %200 = vsyncadd [#allocation10], 0
          %s201 = sshll.u32 %s3, 4
          %s202 = int_to_ptr.hbm [resolvable:$true] %s201
          %s203 = sshll.u32 [#allocation9], 4
          %s204 = int_to_ptr.vmem [resolvable:$true] %s203
          %209 = dma.hbm_to_vmem [thread:$0]  %s202, 512, %s204, [#allocation10], 64, 64, 4
        $region24: #{tpu_custom_call.1} parent=11 // pred_fallthru
          _
        // Predicated region
        $region25: #{tpu_custom_call.1} parent=11 // pred_check
          %p210 = pneg %p129
        $region26: #{tpu_custom_call.1} parent=11 // pred_check_branch
          %212 = sbr.rel (%p210) target = $region28
        $region27: #{tpu_custom_call.1} parent=11 // pred_region
          _
        $region28: #{tpu_custom_call.1} parent=11 // pred_fallthru
          _
      $region12: #{tpu_custom_call.1} parent=5 // pred_fallthru
        _
      %p213 = scmp.lt.s32.totalorder %s19, 8
      // Predicated region
      $region29: #{tpu_custom_call.1} parent=5 // pred_check
        %p214 = pneg %p213
      $region30: #{tpu_custom_call.1} parent=5 // pred_check_branch
        %216 = sbr.rel (%p214) target = $region32
      $region31: #{tpu_custom_call.1} parent=5 // pred_region
        // Predicated region
        $region33: #{tpu_custom_call.1} parent=31 // pred_check
          %p217 = pneg %p60
        $region34: #{tpu_custom_call.1} parent=31 // pred_check_branch
          %219 = sbr.rel (%p217) target = $region36
        $region35: #{tpu_custom_call.1} parent=31 // pred_region
          %s220 = sand.u32 %s19, 1
          %s221 = scalar_lea.sflag [#allocation7], %s220
          %s222 = sand.u32 %s50, 1
          %s223 = smul.addr %s222, 4
          %s224 = scalar_lea.vmem [#allocation6], %s223
          %226 = vsyncadd %s221, 0
          %s227 = smul.addr %s19, 4
          %s228 = scalar_lea.hbm %s1, %s227
          %s230 = sshll.u32 %s228, 4
          %s231 = int_to_ptr.hbm [resolvable:$true] %s230
          %s232 = sshll.u32 %s224, 4
          %s233 = int_to_ptr.vmem [resolvable:$true] %s232
          %235 = dma.hbm_to_vmem [thread:$0]  %s231, 64, %s233, %s221
        $region36: #{tpu_custom_call.1} parent=31 // pred_fallthru
          _
      $region32: #{tpu_custom_call.1} parent=5 // pred_fallthru
        _
      %p236 = scmp.le.s32.totalorder 1, %s19
      %p237 = scmp.lt.s32.totalorder %s19, 9
      %p238 = pnand %p236, %p237
      %p239 = pneg %p238
      // Predicated region
      $region37: #{tpu_custom_call.1} parent=5 // pred_check
        _
      $region38: #{tpu_custom_call.1} parent=5 // pred_check_branch
        %241 = sbr.rel (%p238) target = $region40
      $region39: #{tpu_custom_call.1} parent=5 // pred_region
        %s242 = ssub.s32 %s19, 1
        // Predicated region
        $region41: #{tpu_custom_call.1} parent=39 // pred_check
          %p243 = pneg %p40
        $region42: #{tpu_custom_call.1} parent=39 // pred_check_branch
          %245 = sbr.rel (%p243) target = $region44
        $region43: #{tpu_custom_call.1} parent=39 // pred_region
          %247 = dma.done [#allocation4], 128
        $region44: #{tpu_custom_call.1} parent=39 // pred_fallthru
          _
        %s248 = sand.u32 %s24, 1
        %s249 = scalar_lea.sflag [#allocation7], %s248
        %s250 = sand.u32 %s53, 1
        %s251 = smul.addr %s250, 4
        %s252 = scalar_lea.vmem [#allocation6], %s251
        // Predicated region
        $region45: #{tpu_custom_call.1} parent=39 // pred_check
          %p253 = pneg %p66
        $region46: #{tpu_custom_call.1} parent=39 // pred_check_branch
          %255 = sbr.rel (%p253) target = $region48
        $region47: #{tpu_custom_call.1} parent=39 // pred_region
          %257 = dma.done %s249, 64
        $region48: #{tpu_custom_call.1} parent=39 // pred_fallthru
          _
        // Predicated region
        $region49: #{tpu_custom_call.1} parent=39 // pred_check
          %p258 = pneg %p87
        $region50: #{tpu_custom_call.1} parent=39 // pred_check_branch
          %260 = sbr.rel (%p258) target = $region52
        $region51: #{tpu_custom_call.1} parent=39 // pred_region
          %262 = dma.done [#allocation7], 128
        $region52: #{tpu_custom_call.1} parent=39 // pred_fallthru
          _
        // Predicated region
        $region53: #{tpu_custom_call.1} parent=39 // pred_check
          %p263 = pneg %p108
        $region54: #{tpu_custom_call.1} parent=39 // pred_check_branch
          %265 = sbr.rel (%p263) target = $region56
        $region55: #{tpu_custom_call.1} parent=39 // pred_region
          %267 = dma.done [#allocation10], 512
        $region56: #{tpu_custom_call.1} parent=39 // pred_fallthru
          _
        %p268 = pneg %p40
        %p269 = pneg %p37
        %s270 = sand.u32 %s24, 1
        %s271 = scalar_lea.sflag [#allocation7], %s270
        %s272 = sand.u32 %s53, 1
        %s273 = smul.addr %s272, 4
        %s274 = scalar_lea.vmem [#allocation6], %s273
        %p275 = pneg %p66
        %p276 = pneg %p63
        %p277 = pneg %p87
        %p278 = pneg %p84
        %p279 = pneg %p108
        %p280 = pneg %p105
        %p281 = pneg %p129
        %p282 = pneg %p126
        %p283 = pneg %p155
        %p284 = pneg %p152
        %s285 = sand.u32 %s142, 1
        %s286 = scalar_lea.sflag [#allocation5], %s285
        %s287 = sand.u32 %s142, 1
        %s288 = smul.addr %s287, 8
        %s289 = scalar_lea.vmem [#allocation11], %s288
        %p291 = scmp.eq.s32.totalorder %s24, 0
        // Predicated region
        $region57: #{tpu_custom_call.1} parent=39 // pred_check
          %p292 = pneg %p291
        $region58: #{tpu_custom_call.1} parent=39 // pred_check_branch
          %294 = sbr.rel (%p292) target = $region60
        $region59: #{tpu_custom_call.1} parent=39 // pred_region
          %v295 = vld [vmem:[#allocation3] sm:$0xff]
          %vm296 = vcmask 523264
          %297 = vst.msk [vmem:[#allocation2] sm:$0xff] %vm296, %v295
        $region60: #{tpu_custom_call.1} parent=39 // pred_fallthru
          _
        %v298 = vld [vmem:[%s252] sm:$0xf]
        %v299 = vld [vmem:[#allocation2] sm:$0xff]
        %v300 = vpack.c.bf16 %v299, %v299
        %v301 = vld [vmem:[#allocation8] sm:$0xf]
        %v302 = vld [vmem:[#allocation8 + $0x4] sm:$0xf]
        %v303 = vld [vmem:[#allocation9] sm:$0xf]
        %v304 = vld [vmem:[#allocation9 + $0x4] sm:$0xf]
        %v305 = vld [vmem:[#allocation9 + $0x8] sm:$0xf]
        %v306 = vld [vmem:[#allocation9 + $0xc] sm:$0xf]
        %v307 = vld [vmem:[#allocation9 + $0x10] sm:$0xf]
        %v308 = vld [vmem:[#allocation9 + $0x14] sm:$0xf]
        %v309 = vld [vmem:[#allocation9 + $0x18] sm:$0xf]
        %v310 = vld [vmem:[#allocation9 + $0x1c] sm:$0xf]
        %v319 = vunpack.c.l.b16 %v303
        %v320 = vunpack.c.l.b16 %v304
        %v321 = vunpack.c.l.b16 %v305
        %v322 = vunpack.c.l.b16 %v306
        %v323 = vunpack.c.l.b16 %v307
        %v324 = vunpack.c.l.b16 %v308
        %v325 = vunpack.c.l.b16 %v309
        %v326 = vunpack.c.l.b16 %v310
        %v327 = vpack.c.b16 %v320, %v319
        %v328 = vpack.c.b16 %v322, %v321
        %v329 = vpack.c.b16 %v324, %v323
        %v330 = vpack.c.b16 %v326, %v325
        %vm335 = vcmask 523264
        %v337 = vsel %vm335, %v300, 0
        %339 = vmatpush.bf16.msra.mxu0 0
        %340 = vmatpush.bf16.msra.mxu0 0
        %341 = vmatpush.bf16.msra.mxu0 0
        %342 = vmatpush.bf16.msra.mxu0 0
        %343 = vmatpush.bf16.msra.mxu0 %v330
        %344 = vmatpush.bf16.msra.mxu0 %v329
        %345 = vmatpush.bf16.msra.mxu0 %v328
        %346 = vmatpush.bf16.msra.mxu0 %v327
        %347 = vmatmul.bf16.gmra.mxu0 %v337
        %v348 = vpop.f32.mrf.mxu0
        %v349 = vadd.f32 0.0, %v348
        %v350 = vpop.f32.mrf.mxu0
        %351 = vdwg.mxu0
        %v354 = vunpack.c.l.b16 %v301
        %v355 = vunpack.c.l.b16 %v302
        %v356 = vpack.c.b16 %v355, %v354
        %vm358 = vcmask 130048
        %v360 = vsel %vm358, %v298, 0
        %362 = vmatpush.bf16.msra.mxu0 0
        %363 = vmatpush.bf16.msra.mxu0 0
        %364 = vmatpush.bf16.msra.mxu0 0
        %365 = vmatpush.bf16.msra.mxu0 0
        %366 = vmatpush.bf16.msra.mxu0 0
        %367 = vmatpush.bf16.msra.mxu0 0
        %368 = vmatpush.bf16.msra.mxu0 0
        %369 = vmatpush.bf16.msra.mxu0 %v356
        %370 = vmatmul.bf16.gmra.mxu0 %v360
        %v371 = vpop.f32.mrf.mxu0
        %v372 = vadd.f32 %v349, %v371
        %v373 = vpop.f32.mrf.mxu0
        %374 = vdwg.mxu0
        %v375 = vld [vmem:[%s4] sm:$0x1]
        %v377 = vperm.slane %v375, 0
        %v379 = vadd.f32 %v372, %v377
        %380 = vst [vmem:[%s289] sm:$0xff] %v379
        %381 = vst.msk [vmem:[#allocation2] sm:$0xff] %vm335, %v379
        %s382 = sand.u32 %s142, 1
        %s383 = scalar_lea.sflag [#allocation5], %s382
        %s384 = sand.u32 %s142, 1
        %s385 = smul.addr %s384, 8
        %s386 = scalar_lea.vmem [#allocation11], %s385
        // Predicated region
        $region61: #{tpu_custom_call.1} parent=39 // pred_check
          %p387 = pneg %p152
        $region62: #{tpu_custom_call.1} parent=39 // pred_check_branch
          %389 = sbr.rel (%p387) target = $region64
        $region63: #{tpu_custom_call.1} parent=39 // pred_region
          %391 = vsyncadd %s383, 0
          %s392 = smul.addr %s24, 8
          %s393 = scalar_lea.hbm %s5, %s392
          %s395 = sshll.u32 %s386, 4
          %s396 = int_to_ptr.vmem [resolvable:$true] %s395
          %s397 = sshll.u32 %s393, 4
          %s398 = int_to_ptr.hbm [resolvable:$true] %s397
          %400 = dma.vmem_to_hbm [thread:$0]  %s396, 128, %s398, %s383
        $region64: #{tpu_custom_call.1} parent=39 // pred_fallthru
          _
      $region40: #{tpu_custom_call.1} parent=5 // pred_fallthru
        _
      %p401 = scmp.le.s32.totalorder 2, %s19
      // Predicated region
      $region65: #{tpu_custom_call.1} parent=5 // pred_check
        %p402 = pneg %p401
      $region66: #{tpu_custom_call.1} parent=5 // pred_check_branch
        %404 = sbr.rel (%p402) target = $region68
      $region67: #{tpu_custom_call.1} parent=5 // pred_region
        %s405 = ssub.s32 %s19, 2
        // Predicated region
        $region69: #{tpu_custom_call.1} parent=67 // pred_check
          %p406 = pneg %p158
        $region70: #{tpu_custom_call.1} parent=67 // pred_check_branch
          %408 = sbr.rel (%p406) target = $region72
        $region71: #{tpu_custom_call.1} parent=67 // pred_region
          %s409 = sand.u32 %s143, 1
          %s410 = scalar_lea.sflag [#allocation5], %s409
          %s411 = sand.u32 %s143, 1
          %s412 = smul.addr %s411, 8
          %s413 = scalar_lea.vmem [#allocation11], %s412
          %415 = dma.done %s410, 128
        $region72: #{tpu_custom_call.1} parent=67 // pred_fallthru
          _
      $region68: #{tpu_custom_call.1} parent=5 // pred_fallthru
        _
    $region6: #{tpu_custom_call.1} parent=1 // loop_footer
      %s23 = sadd.s32 1, %s19
    $region7: #{tpu_custom_call.1} parent=1 // loop_footer_branch
      %18 = sbr.rel target = $region3
    $region8: #{tpu_custom_call.1} parent=1 // loop_exit
      _
    %416 = vsyncpa [#allocation4], 1
    %s417 = scalar_lea.sflag [#allocation4], 1
    %418 = vsyncpa %s417, 1
    %419 = vsyncpa [#allocation7], 1
    %s420 = scalar_lea.sflag [#allocation7], 1
    %421 = vsyncpa %s420, 1
    %422 = vsyncpa [#allocation10], 1
    %423 = vsyncpa [#allocation5], 1
    %s424 = scalar_lea.sflag [#allocation5], 1
    %425 = vsyncpa %s424, 1

</llo_original>
